<compile_context>
chip_gen: v6e
topology: v6e:2x2x1
jax: 0.10.0
libtpu: 0.0.40
codegen_flags: <defaults>
</compile_context>

<pallas_src>
import functools

import jax
import jax.numpy as jnp
from jax.experimental import pallas as pl
from jax.experimental.pallas import tpu as pltpu


def _round_up(n: int, m: int) -> int:
    return ((n + m - 1) // m) * m


def _actor_kernel(x_ref, w1_ref, w2_ref, b12_ref, wht_ref, bh_ref, out_ref,
                  *, ls_lower: float, ls_upper: float):
    # fc1 + relu : (TB, S) @ (S, 256) -> (TB, 256); f32 accumulation on MXU.
    h1 = jnp.dot(x_ref[...], w1_ref[...], preferred_element_type=jnp.float32)
    h1 = jnp.maximum(h1 + b12_ref[0:1, :], 0.0)

    # fc2 + relu : (TB, 256) @ (256, 256) -> (TB, 256)
    h2 = jnp.dot(h1.astype(w2_ref.dtype), w2_ref[...],
                 preferred_element_type=jnp.float32)
    h2 = jnp.maximum(h2 + b12_ref[1:2, :], 0.0)

    # Fused heads, lane-dense orientation (batch on the lane axis):
    #   (2, 256) . (TB, 256)^T -> (2, TB)    row 0 = mu, row 1 = log_std
    heads = jax.lax.dot_general(
        wht_ref[...], h2.astype(wht_ref.dtype),
        dimension_numbers=(((1,), (1,)), ((), ())),
        preferred_element_type=jnp.float32)
    heads = heads + bh_ref[...]                     # (2, 1) bias, lane broadcast

    # Row 0 (mu) passes through; row 1 (log_std) gets relu+clamp fused into a
    # single clip (lower bound = max(0, min_log_std), folded at trace time).
    out_ref[0:1, :] = heads[0:1, :].astype(out_ref.dtype)
    out_ref[1:2, :] = jnp.clip(heads[1:2, :], ls_lower, ls_upper).astype(out_ref.dtype)


def pack_params(params, compute_dtype=jnp.bfloat16):
    """One-time parameter prep (fuse heads, pack biases, cast matmul operands).

    Call once outside the hot path; `actor_forward` takes the packed dict.
    """
    w1 = params["w1"].astype(compute_dtype)                               # (S, H)
    w2 = params["w2"].astype(compute_dtype)                               # (H, H)
    b12 = jnp.concatenate([params["b1"], params["b2"]], axis=0)           # (2, H)
    w_head_t = jnp.concatenate([params["w_mu"], params["w_ls"]], axis=1).T  # (2, H)
    b_head = jnp.concatenate([params["b_mu"], params["b_ls"]], axis=1).T  # (2, 1)
    return dict(
        w1=w1, w2=w2,
        b12=b12.astype(jnp.float32),
        w_head_t=w_head_t.astype(compute_dtype),
        b_head=b_head.astype(jnp.float32),
    )


def actor_forward(x, packed, *, min_log_std: float, max_log_std: float,
                  block_b: int = 2048):
    """Actor MLP forward, fully inside one Pallas kernel (grid over batch)."""
    B, S = x.shape
    H = packed["w1"].shape[1]
    compute_dtype = packed["w1"].dtype

    # relu(ls) then clamp(lo, hi)  ==  clip(ls, max(0, lo), hi)
    ls_lower = max(0.0, float(min_log_std))
    ls_upper = float(max_log_std)

    # ---- batch tiling -------------------------------------------------------
    # Small batches: one step covering the whole 16-aligned batch (block dims
    # equal the padded array dims, so no (8,128) divisibility is required).
    # Larger batches: lane-aligned (multiple-of-128) tiles and >= 2 grid steps
    # so the "parallel" batch axis can shard across both v7x TensorCores.
    B16 = _round_up(B, 16)
    if B16 < 256:
        TB = B16
        Bp = B16
    else:
        blk = max(128, (int(block_b) // 128) * 128)
        Bp128 = _round_up(B, 128)
        n_steps = max(2, -(-Bp128 // blk))            # ceil, at least 2 steps
        TB = _round_up(-(-Bp128 // n_steps), 128)     # per-step tile, lane-aligned
        Bp = TB * n_steps
    if Bp != B:
        x = jnp.pad(x, ((0, Bp - B), (0, 0)))
    xc = x.astype(compute_dtype)

    kernel = functools.partial(_actor_kernel, ls_lower=ls_lower, ls_upper=ls_upper)

    itemsize = jnp.dtype(compute_dtype).itemsize
    flops = 2 * Bp * (S * H + H * H + H * 2)
    bytes_accessed = ((Bp * S + S * H + H * H + 2 * H) * itemsize  # x + resident weights
                      + (2 * H + 2) * 4                            # packed biases (f32)
                      + 2 * Bp * 4)                                # (2, Bp) f32 output

    out = pl.pallas_call(
        kernel,
        out_shape=jax.ShapeDtypeStruct((2, Bp), jnp.float32),
        grid_spec=pltpu.PrefetchScalarGridSpec(
            num_scalar_prefetch=0,
            grid=(Bp // TB,),
            in_specs=[
                pl.BlockSpec((TB, S), lambda i: (i, 0)),   # x: blocked on batch
                pl.BlockSpec((S, H), lambda i: (0, 0)),    # w1: resident
                pl.BlockSpec((H, H), lambda i: (0, 0)),    # w2: resident
                pl.BlockSpec((2, H), lambda i: (0, 0)),    # b1|b2 packed: resident
                pl.BlockSpec((2, H), lambda i: (0, 0)),    # [w_mu; w_ls]^T: resident
                pl.BlockSpec((2, 1), lambda i: (0, 0)),    # [b_mu; b_ls]: resident
            ],
            out_specs=pl.BlockSpec((2, TB), lambda i: (0, i)),  # lane-dense output
        ),
        compiler_params=pltpu.CompilerParams(
            dimension_semantics=("parallel",)),            # megacore batch shard (v7x)
        cost_estimate=pl.CostEstimate(
            flops=int(flops), transcendentals=0,
            bytes_accessed=int(bytes_accessed)),
    )(xc, packed["w1"], packed["w2"], packed["b12"],
      packed["w_head_t"], packed["b_head"])

    mu = out[0, :B].reshape(B, 1)
    log_std = out[1, :B].reshape(B, 1)
    return mu, log_std


def init_params(key, state_dim, hidden=256):
    """Deterministic synthetic parameter init (uniform, PyTorch-ish scale)."""
    ks = jax.random.split(key, 8)

    def lin(kw, kb, fan_in, fan_out):
        bound = 1.0 / jnp.sqrt(jnp.float32(fan_in))
        w = jax.random.uniform(kw, (fan_in, fan_out), jnp.float32, -bound, bound)
        b = jax.random.uniform(kb, (1, fan_out), jnp.float32, -bound, bound)
        return w, b

    w1, b1 = lin(ks[0], ks[1], state_dim, hidden)
    w2, b2 = lin(ks[2], ks[3], hidden, hidden)
    w_mu, b_mu = lin(ks[4], ks[5], hidden, 1)
    w_ls, b_ls = lin(ks[6], ks[7], hidden, 1)
    return dict(w1=w1, b1=b1, w2=w2, b2=b2,
                w_mu=w_mu, b_mu=b_mu, w_ls=w_ls, b_ls=b_ls)


def actor_forward_ref(x, params, *, min_log_std, max_log_std):
    """Pure-JAX f32 reference for correctness checking."""
    h1 = jnp.maximum(x @ params["w1"] + params["b1"], 0.0)
    h2 = jnp.maximum(h1 @ params["w2"] + params["b2"], 0.0)
    mu = h2 @ params["w_mu"] + params["b_mu"]
    ls = jnp.maximum(h2 @ params["w_ls"] + params["b_ls"], 0.0)
    ls = jnp.clip(ls, min_log_std, max_log_std)
    return mu, ls


if __name__ == "__main__":
    # NOTE: min_log_std = -20 is dead in the reference semantics too:
    # clamp(relu(ls), -20, 2) == clip(ls, 0, 2). Kept as-is to match PyTorch.
    hyper = dict(state_dim=16, max_action=1.0, min_log_std=-20.0, max_log_std=2.0)
    batch = 8

    key = jax.random.PRNGKey(0)
    k_params, k_x = jax.random.split(key)
    params = init_params(k_params, hyper["state_dim"])
    packed = pack_params(params)          # one-time prep, outside the hot path
    x = jax.random.normal(k_x, (batch, hyper["state_dim"]), jnp.float32)

    mu, log_std = actor_forward(
        x, packed,
        min_log_std=hyper["min_log_std"], max_log_std=hyper["max_log_std"])
    jax.block_until_ready((mu, log_std))

    mu_ref, ls_ref = actor_forward_ref(
        x, params,
        min_log_std=hyper["min_log_std"], max_log_std=hyper["max_log_std"])

    assert mu.shape == (batch, 1) and log_std.shape == (batch, 1)
    # bf16 MXU operands with f32 accumulation -> looser tolerance vs f32 ref.
    assert jnp.allclose(mu, mu_ref, atol=3e-2, rtol=3e-2)
    assert jnp.allclose(log_std, ls_ref, atol=3e-2, rtol=3e-2)

    print("KERNEL_OK")
</pallas_src>

<mosaic_0001>
module attributes {stable_mosaic.version = 11 : i64} {
  func.func @_actor_kernel(%arg0: i32, %arg1: memref<16x16xbf16, #tpu.memory_space<vmem>>, %arg2: memref<16x256xbf16, #tpu.memory_space<vmem>>, %arg3: memref<256x256xbf16, #tpu.memory_space<vmem>>, %arg4: memref<2x256xf32, #tpu.memory_space<vmem>>, %arg5: memref<2x256xbf16, #tpu.memory_space<vmem>>, %arg6: memref<2x1xf32, #tpu.memory_space<vmem>>, %arg7: memref<2x16xf32, #tpu.memory_space<vmem>>) attributes {dimension_semantics = [#tpu.dimension_semantics<parallel>], iteration_bounds = array<i64: 1>, scalar_prefetch = 0 : i64, scratch_operands = 0 : i64, tpu.core_type = #tpu.core_type<tc>, window_params = [{transform_indices = @transform_0, window_bounds = array<i64: 16, 16>}, {pipeline_mode = #tpu.pipeline_mode<synchronous>, transform_indices = @transform_1, window_bounds = array<i64: 16, 256>}, {pipeline_mode = #tpu.pipeline_mode<synchronous>, transform_indices = @transform_2, window_bounds = array<i64: 256, 256>}, {pipeline_mode = #tpu.pipeline_mode<synchronous>, transform_indices = @transform_3, window_bounds = array<i64: 2, 256>}, {pipeline_mode = #tpu.pipeline_mode<synchronous>, transform_indices = @transform_4, window_bounds = array<i64: 2, 256>}, {pipeline_mode = #tpu.pipeline_mode<synchronous>, transform_indices = @transform_5, window_bounds = array<i64: 2, 1>}, {transform_indices = @transform_6, window_bounds = array<i64: 2, 16>}]} {
    %c0 = arith.constant 0 : index
    %c0_0 = arith.constant 0 : index
    %0 = vector.load %arg1[%c0, %c0_0] : memref<16x16xbf16, #tpu.memory_space<vmem>>, vector<16x16xbf16>
    %c0_1 = arith.constant 0 : index
    %c0_2 = arith.constant 0 : index
    %1 = vector.load %arg2[%c0_1, %c0_2] : memref<16x256xbf16, #tpu.memory_space<vmem>>, vector<16x256xbf16>
    %cst = arith.constant dense<0.000000e+00> : vector<16x256xf32>
    %2 = tpu.matmul %0, %1, %cst {dimension_numbers = #tpu.dot_dimension_numbers<[1], [0], [0], [1], [0, 0, 1, 1], [], []>} : vector<16x16xbf16>, vector<16x256xbf16>, vector<16x256xf32> -> vector<16x256xf32>
    %c0_3 = arith.constant 0 : index
    %c0_4 = arith.constant 0 : index
    %3 = vector.load %arg4[%c0_3, %c0_4] : memref<2x256xf32, #tpu.memory_space<vmem>>, vector<1x256xf32>
    %4 = vector.broadcast %3 : vector<1x256xf32> to vector<16x256xf32>
    %5 = arith.addf %2, %4 : vector<16x256xf32>
    %cst_5 = arith.constant 0.000000e+00 : f32
    %6 = vector.broadcast %cst_5 : f32 to vector<16x256xf32>
    %7 = arith.maximumf %5, %6 : vector<16x256xf32>
    %8 = arith.truncf %7 : vector<16x256xf32> to vector<16x256xbf16>
    %c0_6 = arith.constant 0 : index
    %c0_7 = arith.constant 0 : index
    %9 = vector.load %arg3[%c0_6, %c0_7] : memref<256x256xbf16, #tpu.memory_space<vmem>>, vector<256x256xbf16>
    %cst_8 = arith.constant dense<0.000000e+00> : vector<16x256xf32>
    %10 = tpu.matmul %8, %9, %cst_8 {dimension_numbers = #tpu.dot_dimension_numbers<[1], [0], [0], [1], [0, 0, 1, 1], [], []>} : vector<16x256xbf16>, vector<256x256xbf16>, vector<16x256xf32> -> vector<16x256xf32>
    %c1 = arith.constant 1 : index
    %c0_9 = arith.constant 0 : index
    %11 = vector.load %arg4[%c1, %c0_9] : memref<2x256xf32, #tpu.memory_space<vmem>>, vector<1x256xf32>
    %12 = vector.broadcast %11 : vector<1x256xf32> to vector<16x256xf32>
    %13 = arith.addf %10, %12 : vector<16x256xf32>
    %cst_10 = arith.constant 0.000000e+00 : f32
    %14 = vector.broadcast %cst_10 : f32 to vector<16x256xf32>
    %15 = arith.maximumf %13, %14 : vector<16x256xf32>
    %c0_11 = arith.constant 0 : index
    %c0_12 = arith.constant 0 : index
    %16 = vector.load %arg5[%c0_11, %c0_12] : memref<2x256xbf16, #tpu.memory_space<vmem>>, vector<2x256xbf16>
    %17 = arith.truncf %15 : vector<16x256xf32> to vector<16x256xbf16>
    %cst_13 = arith.constant dense<0.000000e+00> : vector<2x16xf32>
    %18 = tpu.matmul %16, %17, %cst_13 {dimension_numbers = #tpu.dot_dimension_numbers<[1], [1], [0], [0], [0, 0, 1, 0], [], []>} : vector<2x256xbf16>, vector<16x256xbf16>, vector<2x16xf32> -> vector<2x16xf32>
    %c0_14 = arith.constant 0 : index
    %c0_15 = arith.constant 0 : index
    %19 = vector.load %arg6[%c0_14, %c0_15] : memref<2x1xf32, #tpu.memory_space<vmem>>, vector<2x1xf32>
    %20 = vector.broadcast %19 : vector<2x1xf32> to vector<2x16xf32>
    %21 = arith.addf %18, %20 : vector<2x16xf32>
    %22 = vector.extract_strided_slice %21 {offsets = [0, 0], sizes = [1, 16], strides = [1, 1]} : vector<2x16xf32> to vector<1x16xf32>
    %c0_16 = arith.constant 0 : index
    %c0_17 = arith.constant 0 : index
    %23 = vector.load %arg7[%c0_16, %c0_17] : memref<2x16xf32, #tpu.memory_space<vmem>>, vector<1x16xf32>
    tpu.vector_store %arg7[%c0_16, %c0_17], %22 {strides = array<i32>} : memref<2x16xf32, #tpu.memory_space<vmem>>, vector<1x16xf32>,
    %24 = vector.extract_strided_slice %21 {offsets = [1, 0], sizes = [1, 16], strides = [1, 1]} : vector<2x16xf32> to vector<1x16xf32>
    %cst_18 = arith.constant 0.000000e+00 : f32
    %cst_19 = arith.constant 2.000000e+00 : f32
    %25 = vector.broadcast %cst_18 : f32 to vector<1x16xf32>
    %26 = arith.maximumf %25, %24 : vector<1x16xf32>
    %27 = vector.broadcast %cst_19 : f32 to vector<1x16xf32>
    %28 = arith.minimumf %27, %26 : vector<1x16xf32>
    %c1_20 = arith.constant 1 : index
    %c0_21 = arith.constant 0 : index
    %29 = vector.load %arg7[%c1_20, %c0_21] : memref<2x16xf32, #tpu.memory_space<vmem>>, vector<1x16xf32>
    tpu.vector_store %arg7[%c1_20, %c0_21], %28 {strides = array<i32>} : memref<2x16xf32, #tpu.memory_space<vmem>>, vector<1x16xf32>,
    return
  }
  func.func @transform_0(%arg0: i32) -> (i32, i32) {
    %c0_i32 = arith.constant 0 : i32
    %c0_i32_0 = arith.constant 0 : i32
    return %arg0, %c0_i32 : i32, i32
  }
  func.func @transform_1(%arg0: i32) -> (i32, i32) {
    %c0_i32 = arith.constant 0 : i32
    %c0_i32_0 = arith.constant 0 : i32
    %c0_i32_1 = arith.constant 0 : i32
    return %c0_i32, %c0_i32_0 : i32, i32
  }
  func.func @transform_2(%arg0: i32) -> (i32, i32) {
    %c0_i32 = arith.constant 0 : i32
    %c0_i32_0 = arith.constant 0 : i32
    %c0_i32_1 = arith.constant 0 : i32
    return %c0_i32, %c0_i32_0 : i32, i32
  }
  func.func @transform_3(%arg0: i32) -> (i32, i32) {
    %c0_i32 = arith.constant 0 : i32
    %c0_i32_0 = arith.constant 0 : i32
    %c0_i32_1 = arith.constant 0 : i32
    return %c0_i32, %c0_i32_0 : i32, i32
  }
  func.func @transform_4(%arg0: i32) -> (i32, i32) {
    %c0_i32 = arith.constant 0 : i32
    %c0_i32_0 = arith.constant 0 : i32
    %c0_i32_1 = arith.constant 0 : i32
    return %c0_i32, %c0_i32_0 : i32, i32
  }
  func.func @transform_5(%arg0: i32) -> (i32, i32) {
    %c0_i32 = arith.constant 0 : i32
    %c0_i32_0 = arith.constant 0 : i32
    %c0_i32_1 = arith.constant 0 : i32
    return %c0_i32, %c0_i32_0 : i32, i32
  }
  func.func @transform_6(%arg0: i32) -> (i32, i32) {
    %c0_i32 = arith.constant 0 : i32
    %c0_i32_0 = arith.constant 0 : i32
    return %c0_i32, %arg0 : i32, i32
  }
}

</mosaic_0001>

<llo_original>
// kernel: tpu_custom_call.1
$region0: #{tpu_custom_call.1}
  #allocation0 [shape = 'u32[]', space=smem, size = 0x4, offset = 0x4, fixed_abs, tag = 'smem constant byte address 0x4 - core index']
  #allocation1 [shape = 'u32[144,128]{1,0:T(1,128)}', space=vmem, size = 0x12000, scoped, tag = 'internal scratch']
  %s0 = inlined_call_operand.hbm [shape: bf16[16,16], index: 0, kind: input, shape index: {}]
  %s1 = inlined_call_operand.hbm [shape: bf16[16,256], index: 1, kind: input, shape index: {}]
  %s2 = inlined_call_operand.hbm [shape: bf16[256,256], index: 2, kind: input, shape index: {}]
  %s3 = inlined_call_operand.vmem [shape: f32[2,256], index: 3, kind: input, shape index: {}]
  %s4 = inlined_call_operand.vmem [shape: bf16[2,256], index: 4, kind: input, shape index: {}]
  %s5 = inlined_call_operand.vmem [shape: f32[2,1], index: 5, kind: input, shape index: {}]
  %s6 = inlined_call_operand.hbm [shape: f32[2,16], index: 6, kind: output, shape index: {}]
  %s7 = sld [smem:[#allocation0]]
  $region46: #{tpu_custom_call.1} parent=0
    _
  %s9 = ssub.s32 1, %s7
  %s10 = scalar_select 0, %s9, %s7
  $region1: #{tpu_custom_call.1} parent=0
    #allocation2 [shape = 'u8[4096]{0}', space=vmem, size = 0x1000, scoped, tag = 'input window, operand 0, single buffered']
    #allocation3 [shape = 's32[1]{0}', space=sflag, size = 0x4, scoped, tag = 'scoped memory for tpu_custom_call.1']
    #allocation4 [shape = 's32[1]{0}', space=sflag, size = 0x4, scoped, tag = 'scoped memory for tpu_custom_call.1']
    #allocation5 [shape = 'u8[8192]{0}', space=vmem, size = 0x2000, scoped, tag = 'input window, operand 1, single buffered']
    #allocation6 [shape = 's32[1]{0}', space=sflag, size = 0x4, scoped, tag = 'scoped memory for tpu_custom_call.1']
    #allocation7 [shape = 'u8[131072]{0}', space=vmem, size = 0x20000, scoped, tag = 'input window, operand 2, single buffered']
    #allocation8 [shape = 'u8[1024]{0}', space=vmem, size = 0x400, scoped, tag = 'output window, operand 0, single buffered']
    %11 = vsyncpa [#allocation3], 0
    %12 = vsyncpa [#allocation6], 0
    %13 = vsyncpa [#allocation4], 0
    // Predicated region
    $region2: #{tpu_custom_call.1} parent=1 // pred_check
      _
    $region3: #{tpu_custom_call.1} parent=1 // pred_check_branch
      %15 = sbr.rel (0) target = $region5
    $region4: #{tpu_custom_call.1} parent=1 // pred_region
      %s17 = ssub.s32 128, 128
      %18 = vsyncadd [#allocation3], %s17
      %s19 = sshll.u32 [#allocation2], 4
      %s20 = int_to_ptr.vmem [resolvable:$true] %s19
      %25 = dma.hbm_to_vmem [thread:$0]  %s0, 128, %s20, [#allocation3], 64, 64, 4
    $region5: #{tpu_custom_call.1} parent=1 // pred_fallthru
      _
    // Predicated region
    $region6: #{tpu_custom_call.1} parent=1 // pred_check
      _
    $region7: #{tpu_custom_call.1} parent=1 // pred_check_branch
      %27 = sbr.rel (0) target = $region9
    $region8: #{tpu_custom_call.1} parent=1 // pred_region
      %s29 = ssub.s32 256, 256
      %30 = vsyncadd [#allocation6], %s29
      %s31 = sshll.u32 [#allocation5], 4
      %s32 = int_to_ptr.vmem [resolvable:$true] %s31
      %37 = dma.hbm_to_vmem [thread:$0]  %s1, 256, %s32, [#allocation6], 128, 128, 8
    $region9: #{tpu_custom_call.1} parent=1 // pred_fallthru
      _
    // Predicated region
    $region10: #{tpu_custom_call.1} parent=1 // pred_check
      _
    $region11: #{tpu_custom_call.1} parent=1 // pred_check_branch
      %39 = sbr.rel (0) target = $region13
    $region12: #{tpu_custom_call.1} parent=1 // pred_region
      %s41 = ssub.s32 4096, 4096
      %42 = vsyncadd [#allocation6], %s41
      %s43 = sshll.u32 [#allocation7], 4
      %s44 = int_to_ptr.vmem [resolvable:$true] %s43
      %49 = dma.hbm_to_vmem [thread:$0]  %s2, 4096, %s44, [#allocation6], 128, 128, 8
    $region13: #{tpu_custom_call.1} parent=1 // pred_fallthru
      _
    // Predicated region
    $region14: #{tpu_custom_call.1} parent=1 // pred_check
      _
    $region15: #{tpu_custom_call.1} parent=1 // pred_check_branch
      %51 = sbr.rel (0) target = $region17
    $region16: #{tpu_custom_call.1} parent=1 // pred_region
      _
    $region17: #{tpu_custom_call.1} parent=1 // pred_fallthru
      _
    // Predicated region
    $region18: #{tpu_custom_call.1} parent=1 // pred_check
      _
    $region19: #{tpu_custom_call.1} parent=1 // pred_check_branch
      %53 = sbr.rel (0) target = $region21
    $region20: #{tpu_custom_call.1} parent=1 // pred_region
      _
    $region21: #{tpu_custom_call.1} parent=1 // pred_fallthru
      _
    // Predicated region
    $region22: #{tpu_custom_call.1} parent=1 // pred_check
      _
    $region23: #{tpu_custom_call.1} parent=1 // pred_check_branch
      %55 = sbr.rel (0) target = $region25
    $region24: #{tpu_custom_call.1} parent=1 // pred_region
      _
    $region25: #{tpu_custom_call.1} parent=1 // pred_fallthru
      _
    // Predicated region
    $region26: #{tpu_custom_call.1} parent=1 // pred_check
      _
    $region27: #{tpu_custom_call.1} parent=1 // pred_check_branch
      %57 = sbr.rel (0) target = $region29
    $region28: #{tpu_custom_call.1} parent=1 // pred_region
      %58 = dma.done [#allocation3], 128
    $region29: #{tpu_custom_call.1} parent=1 // pred_fallthru
      _
    // Predicated region
    $region30: #{tpu_custom_call.1} parent=1 // pred_check
      _
    $region31: #{tpu_custom_call.1} parent=1 // pred_check_branch
      %60 = sbr.rel (0) target = $region33
    $region32: #{tpu_custom_call.1} parent=1 // pred_region
      %61 = dma.done [#allocation6], 256
    $region33: #{tpu_custom_call.1} parent=1 // pred_fallthru
      _
    // Predicated region
    $region34: #{tpu_custom_call.1} parent=1 // pred_check
      _
    $region35: #{tpu_custom_call.1} parent=1 // pred_check_branch
      %63 = sbr.rel (0) target = $region37
    $region36: #{tpu_custom_call.1} parent=1 // pred_region
      %64 = dma.done [#allocation6], 4096
    $region37: #{tpu_custom_call.1} parent=1 // pred_fallthru
      _
    %v66 = vld [vmem:[#allocation2] sm:$0xf]
    %v67 = vld [vmem:[#allocation2 + $0x4] sm:$0xf]
    %v68 = vld [vmem:[#allocation5] sm:$0xff]
    %v69 = vld [vmem:[#allocation5 + $0x8] sm:$0xff]
    %v70 = vld [vmem:[%s3] ss:$2 sm:$0x3]
    %v72 = vlaneseq
    %v73 = vshrl.u32 %v72, 7
    %v74 = vsub.s32 0, %v73
    %v75 = vrot.slane %v70, %v74
    %v76 = vlaneseq
    %v77 = vshrl.u32 %v76, 7
    %v78 = vsub.s32 1, %v77
    %v79 = vrot.slane %v70, %v78
    %v84 = vunpack.c.l.b16 %v66
    %v85 = vunpack.c.l.b16 %v67
    %v86 = vpack.c.b16 %v85, %v84
    %v89 = vunpack.c.l.b16 %v68
    %v90 = vunpack.c.h.b16 %v68
    %v91 = vunpack.c.l.b16 %v69
    %v92 = vunpack.c.h.b16 %v69
    %v93 = vpack.c.b16 %v91, %v89
    %v94 = vpack.c.b16 %v92, %v90
    %vm97 = vcmask 130048
    %v99 = vsel %vm97, %v86, 0
    %101 = vmatprep.subr.bf16.mxu0 0
    %102 = vmatpush1.bf16.msra.mxu0 0
    %103 = vmatprep.subr.bf16.mxu0 0
    %104 = vmatpush1.bf16.msra.mxu0 0
    %105 = vmatprep.subr.bf16.mxu0 0
    %106 = vmatpush1.bf16.msra.mxu0 0
    %107 = vmatprep.subr.bf16.mxu0 0
    %108 = vmatpush1.bf16.msra.mxu0 0
    %109 = vmatprep.subr.bf16.mxu0 0
    %110 = vmatpush1.bf16.msra.mxu0 0
    %111 = vmatprep.subr.bf16.mxu0 0
    %112 = vmatpush1.bf16.msra.mxu0 0
    %113 = vmatprep.subr.bf16.mxu0 0
    %114 = vmatpush1.bf16.msra.mxu0 0
    %115 = vmatprep.subr.bf16.mxu0 %v94
    %116 = vmatpush1.bf16.msra.mxu0 %v93
    %117 = vmatprep.subr.bf16.mxu0 0
    %118 = vmatpush2.bf16.msra.mxu0 0
    %119 = vmatprep.subr.bf16.mxu0 0
    %120 = vmatpush2.bf16.msra.mxu0 0
    %121 = vmatprep.subr.bf16.mxu0 0
    %122 = vmatpush2.bf16.msra.mxu0 0
    %123 = vmatprep.subr.bf16.mxu0 0
    %124 = vmatpush2.bf16.msra.mxu0 0
    %125 = vmatprep.subr.bf16.mxu0 0
    %126 = vmatpush2.bf16.msra.mxu0 0
    %127 = vmatprep.subr.bf16.mxu0 0
    %128 = vmatpush2.bf16.msra.mxu0 0
    %129 = vmatprep.subr.bf16.mxu0 0
    %130 = vmatpush2.bf16.msra.mxu0 0
    %131 = vmatprep.subr.bf16.mxu0 0
    %132 = vmatpush2.bf16.msra.mxu0 0
    %133 = vmatprep.mubr.bf16.mxu0 0
    %134 = vmatmul.mubr.bf16.gmra.mxu0 %v99
    %v135 = vpop.f32.mrf.mxu0
    %v136 = vadd.f32 %v75, %v135
    %v137 = vpop.f32.mrf.mxu0
    %v138 = vadd.f32 %v79, %v137
    %v139 = vpop.f32.mrf.mxu0
    %v140 = vadd.f32 %v75, %v139
    %v141 = vpop.f32.mrf.mxu0
    %v142 = vadd.f32 %v79, %v141
    %143 = vdwg.mxu0
    %v144 = vmax.f32 %v136, 0.0
    %v145 = vmax.f32 %v138, 0.0
    %v146 = vmax.f32 %v140, 0.0
    %v147 = vmax.f32 %v142, 0.0
    %v148 = vpack.c.bf16 %v146, %v144
    %v149 = vpack.c.bf16 %v147, %v145
    %v150 = vld [vmem:[#allocation7] sm:$0xff]
    %v151 = vld [vmem:[#allocation7 + $0x8] sm:$0xff]
    %v152 = vld [vmem:[#allocation7 + $0x10] sm:$0xff]
    %v153 = vld [vmem:[#allocation7 + $0x18] sm:$0xff]
    %v154 = vld [vmem:[#allocation7 + $0x20] sm:$0xff]
    %v155 = vld [vmem:[#allocation7 + $0x28] sm:$0xff]
    %v156 = vld [vmem:[#allocation7 + $0x30] sm:$0xff]
    %v157 = vld [vmem:[#allocation7 + $0x38] sm:$0xff]
    %v158 = vld [vmem:[#allocation7 + $0x40] sm:$0xff]
    %v159 = vld [vmem:[#allocation7 + $0x48] sm:$0xff]
    %v160 = vld [vmem:[#allocation7 + $0x50] sm:$0xff]
    %v161 = vld [vmem:[#allocation7 + $0x58] sm:$0xff]
    %v162 = vld [vmem:[#allocation7 + $0x60] sm:$0xff]
    %v163 = vld [vmem:[#allocation7 + $0x68] sm:$0xff]
    %v164 = vld [vmem:[#allocation7 + $0x70] sm:$0xff]
    %v165 = vld [vmem:[#allocation7 + $0x78] sm:$0xff]
    %v166 = vld [vmem:[#allocation7 + $0x80] sm:$0xff]
    %v167 = vld [vmem:[#allocation7 + $0x88] sm:$0xff]
    %v168 = vld [vmem:[#allocation7 + $0x90] sm:$0xff]
    %v169 = vld [vmem:[#allocation7 + $0x98] sm:$0xff]
    %v170 = vld [vmem:[#allocation7 + $0xa0] sm:$0xff]
    %v171 = vld [vmem:[#allocation7 + $0xa8] sm:$0xff]
    %v172 = vld [vmem:[#allocation7 + $0xb0] sm:$0xff]
    %v173 = vld [vmem:[#allocation7 + $0xb8] sm:$0xff]
    %v174 = vld [vmem:[#allocation7 + $0xc0] sm:$0xff]
    %v175 = vld [vmem:[#allocation7 + $0xc8] sm:$0xff]
    %v176 = vld [vmem:[#allocation7 + $0xd0] sm:$0xff]
    %v177 = vld [vmem:[#allocation7 + $0xd8] sm:$0xff]
    %v178 = vld [vmem:[#allocation7 + $0xe0] sm:$0xff]
    %v179 = vld [vmem:[#allocation7 + $0xe8] sm:$0xff]
    %v180 = vld [vmem:[#allocation7 + $0xf0] sm:$0xff]
    %v181 = vld [vmem:[#allocation7 + $0xf8] sm:$0xff]
    %s182 = scalar_lea.vmem %s3, 1
    %v183 = vld [vmem:[%s182] ss:$2 sm:$0x3]
    %v185 = vlaneseq
    %v186 = vshrl.u32 %v185, 7
    %v187 = vsub.s32 0, %v186
    %v188 = vrot.slane %v183, %v187
    %v189 = vlaneseq
    %v190 = vshrl.u32 %v189, 7
    %v191 = vsub.s32 1, %v190
    %v192 = vrot.slane %v183, %v191
    %v227 = vunpack.c.l.b16 %v150
    %v228 = vunpack.c.h.b16 %v150
    %v229 = vunpack.c.l.b16 %v151
    %v230 = vunpack.c.h.b16 %v151
    %v231 = vunpack.c.l.b16 %v152
    %v232 = vunpack.c.h.b16 %v152
    %v233 = vunpack.c.l.b16 %v153
    %v234 = vunpack.c.h.b16 %v153
    %v235 = vunpack.c.l.b16 %v154
    %v236 = vunpack.c.h.b16 %v154
    %v237 = vunpack.c.l.b16 %v155
    %v238 = vunpack.c.h.b16 %v155
    %v239 = vunpack.c.l.b16 %v156
    %v240 = vunpack.c.h.b16 %v156
    %v241 = vunpack.c.l.b16 %v157
    %v242 = vunpack.c.h.b16 %v157
    %v243 = vunpack.c.l.b16 %v158
    %v244 = vunpack.c.h.b16 %v158
    %v245 = vunpack.c.l.b16 %v159
    %v246 = vunpack.c.h.b16 %v159
    %v247 = vunpack.c.l.b16 %v160
    %v248 = vunpack.c.h.b16 %v160
    %v249 = vunpack.c.l.b16 %v161
    %v250 = vunpack.c.h.b16 %v161
    %v251 = vunpack.c.l.b16 %v162
    %v252 = vunpack.c.h.b16 %v162
    %v253 = vunpack.c.l.b16 %v163
    %v254 = vunpack.c.h.b16 %v163
    %v255 = vunpack.c.l.b16 %v164
    %v256 = vunpack.c.h.b16 %v164
    %v257 = vunpack.c.l.b16 %v165
    %v258 = vunpack.c.h.b16 %v165
    %v259 = vunpack.c.l.b16 %v166
    %v260 = vunpack.c.h.b16 %v166
    %v261 = vunpack.c.l.b16 %v167
    %v262 = vunpack.c.h.b16 %v167
    %v263 = vunpack.c.l.b16 %v168
    %v264 = vunpack.c.h.b16 %v168
    %v265 = vunpack.c.l.b16 %v169
    %v266 = vunpack.c.h.b16 %v169
    %v267 = vunpack.c.l.b16 %v170
    %v268 = vunpack.c.h.b16 %v170
    %v269 = vunpack.c.l.b16 %v171
    %v270 = vunpack.c.h.b16 %v171
    %v271 = vunpack.c.l.b16 %v172
    %v272 = vunpack.c.h.b16 %v172
    %v273 = vunpack.c.l.b16 %v173
    %v274 = vunpack.c.h.b16 %v173
    %v275 = vunpack.c.l.b16 %v174
    %v276 = vunpack.c.h.b16 %v174
    %v277 = vunpack.c.l.b16 %v175
    %v278 = vunpack.c.h.b16 %v175
    %v279 = vunpack.c.l.b16 %v176
    %v280 = vunpack.c.h.b16 %v176
    %v281 = vunpack.c.l.b16 %v177
    %v282 = vunpack.c.h.b16 %v177
    %v283 = vunpack.c.l.b16 %v178
    %v284 = vunpack.c.h.b16 %v178
    %v285 = vunpack.c.l.b16 %v179
    %v286 = vunpack.c.h.b16 %v179
    %v287 = vunpack.c.l.b16 %v180
    %v288 = vunpack.c.h.b16 %v180
    %v289 = vunpack.c.l.b16 %v181
    %v290 = vunpack.c.h.b16 %v181
    %v291 = vpack.c.b16 %v229, %v227
    %v292 = vpack.c.b16 %v230, %v228
    %v293 = vpack.c.b16 %v233, %v231
    %v294 = vpack.c.b16 %v234, %v232
    %v295 = vpack.c.b16 %v237, %v235
    %v296 = vpack.c.b16 %v238, %v236
    %v297 = vpack.c.b16 %v241, %v239
    %v298 = vpack.c.b16 %v242, %v240
    %v299 = vpack.c.b16 %v245, %v243
    %v300 = vpack.c.b16 %v246, %v244
    %v301 = vpack.c.b16 %v249, %v247
    %v302 = vpack.c.b16 %v250, %v248
    %v303 = vpack.c.b16 %v253, %v251
    %v304 = vpack.c.b16 %v254, %v252
    %v305 = vpack.c.b16 %v257, %v255
    %v306 = vpack.c.b16 %v258, %v256
    %v307 = vpack.c.b16 %v261, %v259
    %v308 = vpack.c.b16 %v262, %v260
    %v309 = vpack.c.b16 %v265, %v263
    %v310 = vpack.c.b16 %v266, %v264
    %v311 = vpack.c.b16 %v269, %v267
    %v312 = vpack.c.b16 %v270, %v268
    %v313 = vpack.c.b16 %v273, %v271
    %v314 = vpack.c.b16 %v274, %v272
    %v315 = vpack.c.b16 %v277, %v275
    %v316 = vpack.c.b16 %v278, %v276
    %v317 = vpack.c.b16 %v281, %v279
    %v318 = vpack.c.b16 %v282, %v280
    %v319 = vpack.c.b16 %v285, %v283
    %v320 = vpack.c.b16 %v286, %v284
    %v321 = vpack.c.b16 %v289, %v287
    %v322 = vpack.c.b16 %v290, %v288
    %355 = vmatprep.subr.bf16.mxu0 %v306
    %356 = vmatpush1.bf16.msra.mxu0 %v305
    %357 = vmatprep.subr.bf16.mxu0 %v304
    %358 = vmatpush1.bf16.msra.mxu0 %v303
    %359 = vmatprep.subr.bf16.mxu0 %v302
    %360 = vmatpush1.bf16.msra.mxu0 %v301
    %361 = vmatprep.subr.bf16.mxu0 %v300
    %362 = vmatpush1.bf16.msra.mxu0 %v299
    %363 = vmatprep.subr.bf16.mxu0 %v298
    %364 = vmatpush1.bf16.msra.mxu0 %v297
    %365 = vmatprep.subr.bf16.mxu0 %v296
    %366 = vmatpush1.bf16.msra.mxu0 %v295
    %367 = vmatprep.subr.bf16.mxu0 %v294
    %368 = vmatpush1.bf16.msra.mxu0 %v293
    %369 = vmatprep.subr.bf16.mxu0 %v292
    %370 = vmatpush1.bf16.msra.mxu0 %v291
    %371 = vmatprep.subr.bf16.mxu0 %v322
    %372 = vmatpush2.bf16.msra.mxu0 %v321
    %373 = vmatprep.subr.bf16.mxu0 %v320
    %374 = vmatpush2.bf16.msra.mxu0 %v319
    %375 = vmatprep.subr.bf16.mxu0 %v318
    %376 = vmatpush2.bf16.msra.mxu0 %v317
    %377 = vmatprep.subr.bf16.mxu0 %v316
    %378 = vmatpush2.bf16.msra.mxu0 %v315
    %379 = vmatprep.subr.bf16.mxu0 %v314
    %380 = vmatpush2.bf16.msra.mxu0 %v313
    %381 = vmatprep.subr.bf16.mxu0 %v312
    %382 = vmatpush2.bf16.msra.mxu0 %v311
    %383 = vmatprep.subr.bf16.mxu0 %v310
    %384 = vmatpush2.bf16.msra.mxu0 %v309
    %385 = vmatprep.subr.bf16.mxu0 %v308
    %386 = vmatpush2.bf16.msra.mxu0 %v307
    %387 = vmatprep.mubr.bf16.mxu0 %v149
    %388 = vmatmul.mubr.bf16.gmra.mxu0 %v148
    %v389 = vpop.f32.mrf.mxu0
    %v390 = vadd.f32 %v188, %v389
    %v391 = vpop.f32.mrf.mxu0
    %v392 = vadd.f32 %v192, %v391
    %v393 = vpop.f32.mrf.mxu0
    %v394 = vadd.f32 %v188, %v393
    %v395 = vpop.f32.mrf.mxu0
    %v396 = vadd.f32 %v192, %v395
    %397 = vdwg.mxu0
    %v398 = vmax.f32 %v390, 0.0
    %v399 = vmax.f32 %v392, 0.0
    %v400 = vmax.f32 %v394, 0.0
    %v401 = vmax.f32 %v396, 0.0
    %v402 = vld [vmem:[%s4] sm:$0x3]
    %v403 = vpack.c.bf16 %v400, %v398
    %v404 = vpack.c.bf16 %v401, %v399
    %v405 = vld [vmem:[%s5] sm:$0x3]
    %407 = vset.pattern.permute.xlu0 0
    %408 = vperm.xlu0 %407, %v405
    %v409 = vpop.permute.xlu0 %408
    %v413 = vunpack.c.l.s4 1966171168
    %v414 = vunpack.c.0.s8 %v413
    %v415 = vlaneseq
    %v416 = vshrl.u32 %v415, 7
    %v417 = vsub.s32 %v414, %v416
    %v418 = vrot.slane %v402, %v417
    %v419 = vcombine.high %v418, %v418
    %v421 = vunpack.c.l.s4 1966171168
    %v422 = vunpack.c.0.s8 %v421
    %v423 = vlaneseq
    %v424 = vshrl.u32 %v423, 7
    %v425 = vsub.s32 %v422, %v424
    %v426 = vrot.slane %v418, %v425
    %v428 = vunpack.c.l.s4 1966171168
    %v429 = vunpack.c.0.s8 %v428
    %v430 = vlaneseq
    %v431 = vshrl.u32 %v430, 7
    %v432 = vsub.s32 %v429, %v431
    %v433 = vrot.slane %v419, %v432
    %436 = vmatprep.subr.bf16.mxu0 0
    %437 = vmatpush1.bf16.xpose.msra.mxu0 0
    %438 = vmatprep.subr.bf16.mxu0 0
    %439 = vmatpush1.bf16.xpose.msra.mxu0 0
    %440 = vmatprep.subr.bf16.mxu0 0
    %441 = vmatpush1.bf16.xpose.msra.mxu0 0
    %442 = vmatprep.subr.bf16.mxu0 0
    %443 = vmatpush1.bf16.xpose.msra.mxu0 0
    %444 = vmatprep.subr.bf16.mxu0 0
    %445 = vmatpush1.bf16.xpose.msra.mxu0 0
    %446 = vmatprep.subr.bf16.mxu0 0
    %447 = vmatpush1.bf16.xpose.msra.mxu0 0
    %448 = vmatprep.subr.bf16.mxu0 0
    %449 = vmatpush1.bf16.xpose.msra.mxu0 0
    %450 = vmatprep.subr.bf16.mxu0 %v404
    %451 = vmatpush1.bf16.xpose.msra.mxu0 %v403
    %452 = vmatprep.subr.bf16.mxu0 0
    %453 = vmatpush2.bf16.xpose.msra.mxu0 0
    %454 = vmatprep.subr.bf16.mxu0 0
    %455 = vmatpush2.bf16.xpose.msra.mxu0 0
    %456 = vmatprep.subr.bf16.mxu0 0
    %457 = vmatpush2.bf16.xpose.msra.mxu0 0
    %458 = vmatprep.subr.bf16.mxu0 0
    %459 = vmatpush2.bf16.xpose.msra.mxu0 0
    %460 = vmatprep.subr.bf16.mxu0 0
    %461 = vmatpush2.bf16.xpose.msra.mxu0 0
    %462 = vmatprep.subr.bf16.mxu0 0
    %463 = vmatpush2.bf16.xpose.msra.mxu0 0
    %464 = vmatprep.subr.bf16.mxu0 0
    %465 = vmatpush2.bf16.xpose.msra.mxu0 0
    %466 = vmatprep.subr.bf16.mxu0 0
    %467 = vmatpush2.bf16.xpose.msra.mxu0 0
    %468 = vmatprep.mubr.bf16.mxu0 %v433
    %469 = vmatmul.mubr.bf16.gmra.mxu0 %v426
    %v470 = vpop.f32.mrf.mxu0
    %v471 = vadd.f32 %v409, %v470
    %v472 = vpop.f32.mrf.mxu0
    %v473 = vpop.f32.mrf.mxu0
    %v474 = vpop.f32.mrf.mxu0
    %475 = vdwg.mxu0
    %vm476 = vcmask 122880
    %477 = vst.msk [vmem:[#allocation8] sm:$0x1] %vm476, %v471
    %v478 = vmax.f32 %v471, 0.0
    %v479 = vmin.f32 %v478, 2.0
    %vm480 = vcmask 123905
    %481 = vst.msk [vmem:[#allocation8] sm:$0x2] %vm480, %v479
    // Predicated region
    $region38: #{tpu_custom_call.1} parent=1 // pred_check
      _
    $region39: #{tpu_custom_call.1} parent=1 // pred_check_branch
      %483 = sbr.rel (0) target = $region41
    $region40: #{tpu_custom_call.1} parent=1 // pred_region
      %s485 = ssub.s32 32, 32
      %486 = vsyncadd [#allocation4], %s485
      %s488 = sshll.u32 [#allocation8], 4
      %s489 = int_to_ptr.vmem [resolvable:$true] %s488
      %491 = dma.vmem_to_hbm [thread:$0]  %s489, 32, %s6, [#allocation4]
    $region41: #{tpu_custom_call.1} parent=1 // pred_fallthru
      _
    // Predicated region
    $region42: #{tpu_custom_call.1} parent=1 // pred_check
      _
    $region43: #{tpu_custom_call.1} parent=1 // pred_check_branch
      %493 = sbr.rel (0) target = $region45
    $region44: #{tpu_custom_call.1} parent=1 // pred_region
      %494 = dma.done [#allocation4], 32
    $region45: #{tpu_custom_call.1} parent=1 // pred_fallthru
      _
    %495 = vsyncpa [#allocation3], 1
    %496 = vsyncpa [#allocation6], 1
    %497 = vsyncpa [#allocation4], 1

</llo_original>
